<compile_context>
chip_gen: v6e
topology: v6e:2x2x1
jax: 0.10.0
libtpu: 0.0.40
codegen_flags: <defaults>
</compile_context>

<pallas_src>
import math

import jax
import jax.numpy as jnp
import numpy as np
from jax.experimental import pallas as pl
from jax.experimental.pallas import tpu as pltpu


def _graphconv_kernel(x_ref, w_ref, adjo_ref, diag_ref, shift_ref, o_ref):
    # x_ref:     (TB, J, Din)      batch block
    # w_ref:     (Din, 2*Dp)       [W0*bn_scale | W1*bn_scale], zero-padded cols
    # adjo_ref:  (TB*J, TB*J)      block-diag off-diagonal softmax adjacency
    # diag_ref:  (TB*J, 1)         diag of softmax adjacency, tiled over TB
    # shift_ref: (1, Dp)           bias*scale + bn_shift, zero-padded
    # o_ref:     (TB, J, Dp)
    tb, J, Din = x_ref.shape
    Dp = o_ref.shape[-1]

    # Collapse leading dims only -> layout-preserving reshape.
    x2 = x_ref[...].reshape(tb * J, Din)

    # One fused MXU matmul covers both projections (h0 | h1).
    h = jnp.dot(x2, w_ref[...], preferred_element_type=jnp.float32)  # (TB*J, 2*Dp)
    h0 = h[:, :Dp]            # static, 128-lane-aligned slices
    h1 = h[:, Dp:]

    # Self term: diagonal adjacency is a per-row scale (VPU, no MXU).
    y = diag_ref[...] * h0
    # Neighbor term: single matmul against the shared block-diag adjacency.
    y = y + jnp.dot(adjo_ref[...], h1, preferred_element_type=jnp.float32)
    # Folded bias + BN shift, then ReLU.
    y = jnp.maximum(y + shift_ref[...], 0.0)

    o_ref[...] = y.reshape(tb, J, Dp).astype(o_ref.dtype)


def graphconv_forward(x, W, e, adj, bias, bn_gamma, bn_beta, bn_mean, bn_var,
                      bn_eps=1e-5, block_batch=None):
    """x: (B, J, Din) float32 -> (B, J, Dout) float32."""
    B, J, Din = x.shape
    Dout = W.shape[-1]
    LANE = 128
    Dp = ((Dout + LANE - 1) // LANE) * LANE              # lane-dense output width

    # ---- parameter-derived glue (runs once; adj must be static/concrete) ----
    # TODO(synk): np.argwhere requires a concrete adjacency; hoist this block
    # out if graphconv_forward is ever jitted with a traced adj.
    mask_np = np.asarray(adj) > 0
    nz = np.argwhere(mask_np)                            # row-major == torch .nonzero()
    logits = jnp.where(jnp.asarray(mask_np), 0.0, -9e15)
    logits = logits.at[nz[:, 0], nz[:, 1]].set(e)
    adj_sm = jax.nn.softmax(logits, axis=1)              # (J, J)
    diag_vec = jnp.diag(adj_sm).reshape(J, 1)            # self-loop weights
    adj_off = adj_sm * (1.0 - jnp.eye(J, dtype=adj_sm.dtype))

    # Fold eval-mode BN + bias:  y_bn = ((A@h + bias) - mean)*gamma/std + beta
    #   => scale folds into W, bias*scale + (beta - mean*scale) becomes shift.
    inv_std = 1.0 / jnp.sqrt(bn_var + bn_eps)
    scale = bn_gamma * inv_std                            # (Dout,)
    shift = bias * scale + (bn_beta - bn_mean * scale)    # (Dout,)
    pad_c = Dp - Dout
    W0f = jnp.pad(W[0] * scale[None, :], ((0, 0), (0, pad_c)))   # (Din, Dp)
    W1f = jnp.pad(W[1] * scale[None, :], ((0, 0), (0, pad_c)))   # (Din, Dp)
    w_cat = jnp.concatenate([W0f, W1f], axis=1)                  # (Din, 2*Dp)
    shift_p = jnp.pad(shift, (0, pad_c)).reshape(1, Dp)

    # ---- batch blocking ------------------------------------------------------
    # Amortize per-grid-step overhead (~0.35 us/step); keep >=2 steps when
    # B>=2 so both v7x TensorCores get work; cap TB*J at 128 rows (one MXU
    # operand tile) so the block-diag adjacency stays small.
    if block_batch is None:
        rows_cap = max(1, 128 // J)
        block_batch = max(1, min(rows_cap, (B + 1) // 2))
    tb = int(block_batch)
    nblocks = -(-B // tb)
    Bp = nblocks * tb
    if Bp != B:
        x = jnp.pad(x, ((0, Bp - B), (0, 0), (0, 0)))

    diag_tiled = jnp.tile(diag_vec, (tb, 1))                           # (TB*J, 1)
    adj_off_blk = jnp.kron(jnp.eye(tb, dtype=adj_off.dtype), adj_off)  # (TB*J, TB*J)

    grid_spec = pltpu.PrefetchScalarGridSpec(
        num_scalar_prefetch=0,
        grid=(nblocks,),
        in_specs=[
            pl.BlockSpec((tb, J, Din), lambda b: (b, 0, 0)),     # x block
            pl.BlockSpec((Din, 2 * Dp), lambda b: (0, 0)),       # fused weights
            pl.BlockSpec((tb * J, tb * J), lambda b: (0, 0)),    # block-diag adj_off
            pl.BlockSpec((tb * J, 1), lambda b: (0, 0)),         # diag scale
            pl.BlockSpec((1, Dp), lambda b: (0, 0)),             # folded shift
        ],
        out_specs=pl.BlockSpec((tb, J, Dp), lambda b: (b, 0, 0)),
    )

    out_padded = pl.pallas_call(
        _graphconv_kernel,
        out_shape=jax.ShapeDtypeStruct((Bp, J, Dp), jnp.float32),
        grid_spec=grid_spec,
        compiler_params=pltpu.CompilerParams(
            dimension_semantics=("parallel",)),
    )(x, w_cat, adj_off_blk, diag_tiled, shift_p)

    return out_padded[:B, :, :Dout]


def _reference(x, W, e, adj, bias, bn_gamma, bn_beta, bn_mean, bn_var,
               bn_eps=1e-5):
    """Pure-JAX reference of the same forward (sanity check)."""
    J = adj.shape[0]
    mask_np = np.asarray(adj) > 0
    nz = np.argwhere(mask_np)
    logits = jnp.where(jnp.asarray(mask_np), 0.0, -9e15).at[nz[:, 0], nz[:, 1]].set(e)
    A = jax.nn.softmax(logits, axis=1)
    eye = jnp.eye(J)
    h0 = x @ W[0]
    h1 = x @ W[1]
    y = (A * eye) @ h0 + (A * (1 - eye)) @ h1 + bias
    y = (y - bn_mean) / jnp.sqrt(bn_var + bn_eps) * bn_gamma + bn_beta
    return jnp.maximum(y, 0.0)


if __name__ == "__main__":
    B, J, Din, Dout = 4, 16, 32, 32
    key = jax.random.PRNGKey(0)
    kx, kw, kb, kg, kbt, km, kv = jax.random.split(key, 7)

    # Input: (B, J, Din) -- batch of keypoint features (channels-last layout).
    x = jax.random.normal(kx, (B, J, Din), dtype=jnp.float32)

    # Simple chain-graph adjacency with self loops (adj > 0 defines the mask).
    adj_np = np.eye(J, dtype=np.float32)
    for i in range(J - 1):
        adj_np[i, i + 1] = 1.0
        adj_np[i + 1, i] = 1.0
    adj = jnp.asarray(adj_np)

    # SemGraphConv parameters (same shapes/init style as PyTorch).
    gain = 1.414
    limit = gain * math.sqrt(6.0 / (Din + Dout))          # xavier_uniform_
    W = jax.random.uniform(kw, (2, Din, Dout), minval=-limit, maxval=limit,
                           dtype=jnp.float32)
    n_edges = int((adj_np > 0).sum())
    e = jnp.ones((n_edges,), dtype=jnp.float32)            # nn.init.constant_(e, 1)
    stdv = 1.0 / math.sqrt(Dout)
    bias = jax.random.uniform(kb, (Dout,), minval=-stdv, maxval=stdv,
                              dtype=jnp.float32)

    # BatchNorm1d params / running stats.
    # TODO(synk): training-mode (batch-statistics) BN is not implemented; the
    # kernel uses running-stats (inference) BN folded into the weights/shift.
    bn_gamma = 1.0 + 0.1 * jax.random.normal(kg, (Dout,), dtype=jnp.float32)
    bn_beta = 0.1 * jax.random.normal(kbt, (Dout,), dtype=jnp.float32)
    bn_mean = 0.1 * jax.random.normal(km, (Dout,), dtype=jnp.float32)
    bn_var = jnp.abs(1.0 + 0.1 * jax.random.normal(kv, (Dout,),
                                                   dtype=jnp.float32))

    out = graphconv_forward(x, W, e, adj, bias, bn_gamma, bn_beta,
                            bn_mean, bn_var)
    out = jax.block_until_ready(out)

    ref = _reference(x, W, e, adj, bias, bn_gamma, bn_beta, bn_mean, bn_var)
    assert out.shape == (B, J, Dout)
    np.testing.assert_allclose(np.asarray(out), np.asarray(ref),
                               rtol=1e-5, atol=1e-5)
    print("KERNEL_OK")
</pallas_src>

<mosaic_0001>
module attributes {stable_mosaic.version = 11 : i64} {
  func.func @_graphconv_kernel(%arg0: i32, %arg1: memref<2x16x32xf32, #tpu.memory_space<vmem>>, %arg2: memref<32x256xf32, #tpu.memory_space<vmem>>, %arg3: memref<32x32xf32, #tpu.memory_space<vmem>>, %arg4: memref<32x1xf32, #tpu.memory_space<vmem>>, %arg5: memref<1x128xf32, #tpu.memory_space<vmem>>, %arg6: memref<2x16x128xf32, #tpu.memory_space<vmem>>) attributes {dimension_semantics = [#tpu.dimension_semantics<parallel>], iteration_bounds = array<i64: 2>, scalar_prefetch = 0 : i64, scratch_operands = 0 : i64, tpu.core_type = #tpu.core_type<tc>, window_params = [{transform_indices = @transform_0, window_bounds = array<i64: 2, 16, 32>}, {pipeline_mode = #tpu.pipeline_mode<synchronous>, transform_indices = @transform_1, window_bounds = array<i64: 32, 256>}, {pipeline_mode = #tpu.pipeline_mode<synchronous>, transform_indices = @transform_2, window_bounds = array<i64: 32, 32>}, {pipeline_mode = #tpu.pipeline_mode<synchronous>, transform_indices = @transform_3, window_bounds = array<i64: 32, 1>}, {pipeline_mode = #tpu.pipeline_mode<synchronous>, transform_indices = @transform_4, window_bounds = array<i64: 1, 128>}, {transform_indices = @transform_5, window_bounds = array<i64: 2, 16, 128>}]} {
    %c0 = arith.constant 0 : index
    %c0_0 = arith.constant 0 : index
    %c0_1 = arith.constant 0 : index
    %0 = vector.load %arg1[%c0, %c0_0, %c0_1] : memref<2x16x32xf32, #tpu.memory_space<vmem>>, vector<2x16x32xf32>
    %1 = vector.shape_cast %0 : vector<2x16x32xf32> to vector<32x32xf32>
    %c0_2 = arith.constant 0 : index
    %c0_3 = arith.constant 0 : index
    %2 = vector.load %arg2[%c0_2, %c0_3] : memref<32x256xf32, #tpu.memory_space<vmem>>, vector<32x256xf32>
    %cst = arith.constant dense<0.000000e+00> : vector<32x256xf32>
    %3 = tpu.matmul %1, %2, %cst {dimension_numbers = #tpu.dot_dimension_numbers<[1], [0], [0], [1], [0, 0, 1, 1], [], []>} : vector<32x32xf32>, vector<32x256xf32>, vector<32x256xf32> -> vector<32x256xf32>
    %4 = vector.extract_strided_slice %3 {offsets = [0, 0], sizes = [32, 128], strides = [1, 1]} : vector<32x256xf32> to vector<32x128xf32>
    %5 = vector.extract_strided_slice %3 {offsets = [0, 128], sizes = [32, 128], strides = [1, 1]} : vector<32x256xf32> to vector<32x128xf32>
    %c0_4 = arith.constant 0 : index
    %c0_5 = arith.constant 0 : index
    %6 = vector.load %arg4[%c0_4, %c0_5] : memref<32x1xf32, #tpu.memory_space<vmem>>, vector<32x1xf32>
    %7 = vector.broadcast %6 : vector<32x1xf32> to vector<32x128xf32>
    %8 = arith.mulf %7, %4 : vector<32x128xf32>
    %c0_6 = arith.constant 0 : index
    %c0_7 = arith.constant 0 : index
    %9 = vector.load %arg3[%c0_6, %c0_7] : memref<32x32xf32, #tpu.memory_space<vmem>>, vector<32x32xf32>
    %cst_8 = arith.constant dense<0.000000e+00> : vector<32x128xf32>
    %10 = tpu.matmul %9, %5, %cst_8 {dimension_numbers = #tpu.dot_dimension_numbers<[1], [0], [0], [1], [0, 0, 1, 1], [], []>} : vector<32x32xf32>, vector<32x128xf32>, vector<32x128xf32> -> vector<32x128xf32>
    %11 = arith.addf %8, %10 : vector<32x128xf32>
    %c0_9 = arith.constant 0 : index
    %c0_10 = arith.constant 0 : index
    %12 = vector.load %arg5[%c0_9, %c0_10] : memref<1x128xf32, #tpu.memory_space<vmem>>, vector<1x128xf32>
    %13 = vector.broadcast %12 : vector<1x128xf32> to vector<32x128xf32>
    %14 = arith.addf %11, %13 : vector<32x128xf32>
    %cst_11 = arith.constant 0.000000e+00 : f32
    %15 = vector.broadcast %cst_11 : f32 to vector<32x128xf32>
    %16 = arith.maximumf %14, %15 : vector<32x128xf32>
    %17 = vector.shape_cast %16 : vector<32x128xf32> to vector<2x16x128xf32>
    %c0_12 = arith.constant 0 : index
    %c0_13 = arith.constant 0 : index
    %c0_14 = arith.constant 0 : index
    %18 = vector.load %arg6[%c0_12, %c0_13, %c0_14] : memref<2x16x128xf32, #tpu.memory_space<vmem>>, vector<2x16x128xf32>
    tpu.vector_store %arg6[%c0_12, %c0_13, %c0_14], %17 {strides = array<i32>} : memref<2x16x128xf32, #tpu.memory_space<vmem>>, vector<2x16x128xf32>,
    return
  }
  func.func @transform_0(%arg0: i32) -> (i32, i32, i32) {
    %c0_i32 = arith.constant 0 : i32
    %c0_i32_0 = arith.constant 0 : i32
    %c0_i32_1 = arith.constant 0 : i32
    return %arg0, %c0_i32, %c0_i32_0 : i32, i32, i32
  }
  func.func @transform_1(%arg0: i32) -> (i32, i32) {
    %c0_i32 = arith.constant 0 : i32
    %c0_i32_0 = arith.constant 0 : i32
    %c0_i32_1 = arith.constant 0 : i32
    return %c0_i32, %c0_i32_0 : i32, i32
  }
  func.func @transform_2(%arg0: i32) -> (i32, i32) {
    %c0_i32 = arith.constant 0 : i32
    %c0_i32_0 = arith.constant 0 : i32
    %c0_i32_1 = arith.constant 0 : i32
    return %c0_i32, %c0_i32_0 : i32, i32
  }
  func.func @transform_3(%arg0: i32) -> (i32, i32) {
    %c0_i32 = arith.constant 0 : i32
    %c0_i32_0 = arith.constant 0 : i32
    %c0_i32_1 = arith.constant 0 : i32
    return %c0_i32, %c0_i32_0 : i32, i32
  }
  func.func @transform_4(%arg0: i32) -> (i32, i32) {
    %c0_i32 = arith.constant 0 : i32
    %c0_i32_0 = arith.constant 0 : i32
    %c0_i32_1 = arith.constant 0 : i32
    return %c0_i32, %c0_i32_0 : i32, i32
  }
  func.func @transform_5(%arg0: i32) -> (i32, i32, i32) {
    %c0_i32 = arith.constant 0 : i32
    %c0_i32_0 = arith.constant 0 : i32
    %c0_i32_1 = arith.constant 0 : i32
    return %arg0, %c0_i32, %c0_i32_0 : i32, i32, i32
  }
}

</mosaic_0001>

<llo_original>
// kernel: tpu_custom_call.1
$region0: #{tpu_custom_call.1}
  #allocation0 [shape = 'u32[]', space=smem, size = 0x4, offset = 0x4, fixed_abs, tag = 'smem constant byte address 0x4 - core index']
  #allocation1 [shape = 'u32[144,128]{1,0:T(1,128)}', space=vmem, size = 0x12000, scoped, tag = 'internal scratch']
  %s0 = inlined_call_operand.hbm [shape: f32[4,16,32], index: 0, kind: input, shape index: {}]
  %s1 = inlined_call_operand.hbm [shape: f32[32,256], index: 1, kind: input, shape index: {}]
  %s2 = inlined_call_operand.vmem [shape: f32[32,32], index: 2, kind: input, shape index: {}]
  %s3 = inlined_call_operand.vmem [shape: f32[32,1], index: 3, kind: input, shape index: {}]
  %s4 = inlined_call_operand.vmem [shape: f32[1,128], index: 4, kind: input, shape index: {}]
  %s5 = inlined_call_operand.hbm [shape: f32[4,16,128], index: 5, kind: output, shape index: {}]
  %s6 = sld [smem:[#allocation0]]
  $region61: #{tpu_custom_call.1} parent=0
    _
  %s8 = ssub.s32 1, %s6
  %s9 = scalar_select 0, %s8, %s6
  $region1: #{tpu_custom_call.1} parent=0
    #allocation2 [shape = 'u8[32768]{0}', space=vmem, size = 0x8000, scoped, tag = 'input window, operand 0']
    #allocation3 [shape = 's32[2]{0}', space=sflag, size = 0x8, scoped, tag = 'scoped memory for tpu_custom_call.1']
    #allocation4 [shape = 's32[2]{0}', space=sflag, size = 0x8, scoped, tag = 'scoped memory for tpu_custom_call.1']
    #allocation5 [shape = 'u8[32768]{0}', space=vmem, size = 0x8000, scoped, tag = 'input window, operand 1, single buffered']
    #allocation6 [shape = 's32[1]{0}', space=sflag, size = 0x4, scoped, tag = 'scoped memory for tpu_custom_call.1']
    #allocation7 [shape = 'u8[32768]{0}', space=vmem, size = 0x8000, scoped, tag = 'output window, operand 0']
    %10 = vsyncpa [#allocation3], 0
    %s11 = scalar_lea.sflag [#allocation3], 1
    %12 = vsyncpa %s11, 0
    %13 = vsyncpa [#allocation6], 0
    %14 = vsyncpa [#allocation4], 0
    %s15 = scalar_lea.sflag [#allocation4], 1
    %16 = vsyncpa %s15, 0
    loop: start=0, step=1, limit=4
    $region2: #{tpu_custom_call.1} parent=1 // loop_pre_header
      _
    $region3: #{tpu_custom_call.1} parent=1 // loop_header
      %s18 = sphi 0, %s22
      %p19 = scmp.ge.s32.totalorder %s18, 4
      %s28 = sphi 0, %s30
      %s31 = sphi 0, %s28
      %s32 = sphi 0, %s31
      %s48 = sphi 0, %s32
      %s52 = sphi 0, %s52
      %s54 = sphi 0, %s52
      %s55 = sphi 0, %s54
      %s69 = sphi 0, %s55
      %s73 = sphi 0, %s73
      %s75 = sphi 0, %s73
      %s76 = sphi 0, %s75
      %s90 = sphi 0, %s76
      %s94 = sphi 0, %s94
      %s96 = sphi 0, %s94
      %s97 = sphi 0, %s96
      %s111 = sphi 0, %s97
      %s115 = sphi 0, %s115
      %s117 = sphi 0, %s115
      %s118 = sphi 0, %s117
      %s132 = sphi 0, %s118
      %s138 = sphi 0, %s140
      %s141 = sphi 0, %s138
      %s142 = sphi 0, %s141
      %s158 = sphi 0, %s142
    $region4: #{tpu_custom_call.1} parent=1 // loop_header_branch
      %21 = sbr.rel (%p19) target = $region8
    $region5: #{tpu_custom_call.1} parent=1 // loop_body
      %s23 = ssub.s32 %s18, 1
      %s24 = ssub.s32 %s18, 2
      %s25 = sadd.s32 %s18, 1
      %s26 = ssub.s32 %s18, %s25
      %p27 = scmp.eq.s32.totalorder %s26, 0
      %s29 = sadd.s32 %s28, 1
      %s30 = scalar_select %p27, %s28, %s29
      %p33 = pneg %p27
      %p34 = scmp.eq.s32.totalorder %s18, 1
      %p35 = por %p33, %p34
      %p36 = scmp.ne.s32.totalorder %s28, %s31
      %p37 = scmp.eq.s32.totalorder %s18, 0
      %p38 = por %p36, %p37
      %p39 = scmp.ne.s32.totalorder %s28, %s31
      %p40 = scmp.eq.s32.totalorder %s23, 1
      %p41 = por %p39, %p40
      %p42 = scmp.ne.s32.totalorder %s31, %s32
      %p43 = scmp.eq.s32.totalorder %s23, 0
      %p44 = por %p42, %p43
      %p45 = scmp.ne.s32.totalorder %s31, %s32
      %p46 = scmp.eq.s32.totalorder %s24, 1
      %p47 = por %p45, %p46
      %p49 = scmp.ne.s32.totalorder %s32, %s48
      %p50 = scmp.eq.s32.totalorder %s24, 0
      %p51 = por %p49, %p50
      %s53 = sadd.s32 %s52, 1
      %p56 = scmp.eq.s32.totalorder %s18, 1
      %p57 = scmp.ne.s32.totalorder %s52, %s54
      %p58 = scmp.eq.s32.totalorder %s18, 0
      %p59 = por %p57, %p58
      %p60 = scmp.ne.s32.totalorder %s52, %s54
      %p61 = scmp.eq.s32.totalorder %s23, 1
      %p62 = por %p60, %p61
      %p63 = scmp.ne.s32.totalorder %s54, %s55
      %p64 = scmp.eq.s32.totalorder %s23, 0
      %p65 = por %p63, %p64
      %p66 = scmp.ne.s32.totalorder %s54, %s55
      %p67 = scmp.eq.s32.totalorder %s24, 1
      %p68 = por %p66, %p67
      %p70 = scmp.ne.s32.totalorder %s55, %s69
      %p71 = scmp.eq.s32.totalorder %s24, 0
      %p72 = por %p70, %p71
      %s74 = sadd.s32 %s73, 1
      %p77 = scmp.eq.s32.totalorder %s18, 1
      %p78 = scmp.ne.s32.totalorder %s73, %s75
      %p79 = scmp.eq.s32.totalorder %s18, 0
      %p80 = por %p78, %p79
      %p81 = scmp.ne.s32.totalorder %s73, %s75
      %p82 = scmp.eq.s32.totalorder %s23, 1
      %p83 = por %p81, %p82
      %p84 = scmp.ne.s32.totalorder %s75, %s76
      %p85 = scmp.eq.s32.totalorder %s23, 0
      %p86 = por %p84, %p85
      %p87 = scmp.ne.s32.totalorder %s75, %s76
      %p88 = scmp.eq.s32.totalorder %s24, 1
      %p89 = por %p87, %p88
      %p91 = scmp.ne.s32.totalorder %s76, %s90
      %p92 = scmp.eq.s32.totalorder %s24, 0
      %p93 = por %p91, %p92
      %s95 = sadd.s32 %s94, 1
      %p98 = scmp.eq.s32.totalorder %s18, 1
      %p99 = scmp.ne.s32.totalorder %s94, %s96
      %p100 = scmp.eq.s32.totalorder %s18, 0
      %p101 = por %p99, %p100
      %p102 = scmp.ne.s32.totalorder %s94, %s96
      %p103 = scmp.eq.s32.totalorder %s23, 1
      %p104 = por %p102, %p103
      %p105 = scmp.ne.s32.totalorder %s96, %s97
      %p106 = scmp.eq.s32.totalorder %s23, 0
      %p107 = por %p105, %p106
      %p108 = scmp.ne.s32.totalorder %s96, %s97
      %p109 = scmp.eq.s32.totalorder %s24, 1
      %p110 = por %p108, %p109
      %p112 = scmp.ne.s32.totalorder %s97, %s111
      %p113 = scmp.eq.s32.totalorder %s24, 0
      %p114 = por %p112, %p113
      %s116 = sadd.s32 %s115, 1
      %p119 = scmp.eq.s32.totalorder %s18, 1
      %p120 = scmp.ne.s32.totalorder %s115, %s117
      %p121 = scmp.eq.s32.totalorder %s18, 0
      %p122 = por %p120, %p121
      %p123 = scmp.ne.s32.totalorder %s115, %s117
      %p124 = scmp.eq.s32.totalorder %s23, 1
      %p125 = por %p123, %p124
      %p126 = scmp.ne.s32.totalorder %s117, %s118
      %p127 = scmp.eq.s32.totalorder %s23, 0
      %p128 = por %p126, %p127
      %p129 = scmp.ne.s32.totalorder %s117, %s118
      %p130 = scmp.eq.s32.totalorder %s24, 1
      %p131 = por %p129, %p130
      %p133 = scmp.ne.s32.totalorder %s118, %s132
      %p134 = scmp.eq.s32.totalorder %s24, 0
      %p135 = por %p133, %p134
      %s136 = ssub.s32 %s18, %s25
      %p137 = scmp.eq.s32.totalorder %s136, 0
      %s139 = sadd.s32 %s138, 1
      %s140 = scalar_select %p137, %s138, %s139
      %p143 = pneg %p137
      %p144 = scmp.eq.s32.totalorder %s18, 1
      %p145 = por %p143, %p144
      %p146 = scmp.ne.s32.totalorder %s138, %s141
      %p147 = scmp.eq.s32.totalorder %s18, 0
      %p148 = por %p146, %p147
      %p149 = scmp.ne.s32.totalorder %s138, %s141
      %p150 = scmp.eq.s32.totalorder %s23, 1
      %p151 = por %p149, %p150
      %p152 = scmp.ne.s32.totalorder %s141, %s142
      %p153 = scmp.eq.s32.totalorder %s23, 0
      %p154 = por %p152, %p153
      %p155 = scmp.ne.s32.totalorder %s141, %s142
      %p156 = scmp.eq.s32.totalorder %s24, 1
      %p157 = por %p155, %p156
      %p159 = scmp.ne.s32.totalorder %s142, %s158
      %p160 = scmp.eq.s32.totalorder %s24, 0
      %p161 = por %p159, %p160
      %p162 = scmp.le.s32.totalorder 1, %s18
      %p163 = scmp.lt.s32.totalorder %s18, 3
      %p164 = pnand %p162, %p163
      %p165 = pneg %p164
      // Predicated region
      $region9: #{tpu_custom_call.1} parent=5 // pred_check
        _
      $region10: #{tpu_custom_call.1} parent=5 // pred_check_branch
        %167 = sbr.rel (%p164) target = $region12
      $region11: #{tpu_custom_call.1} parent=5 // pred_region
        %s168 = ssub.s32 %s18, 1
        // Predicated region
        $region13: #{tpu_custom_call.1} parent=11 // pred_check
          %p169 = pneg %p65
        $region14: #{tpu_custom_call.1} parent=11 // pred_check_branch
          %171 = sbr.rel (%p169) target = $region16
        $region15: #{tpu_custom_call.1} parent=11 // pred_region
          %s173 = ssub.s32 1024, 1024
          %174 = vsyncadd [#allocation6], %s173
          %s175 = sshll.u32 [#allocation5], 4
          %s176 = int_to_ptr.vmem [resolvable:$true] %s175
          %181 = dma.hbm_to_vmem [thread:$0]  %s1, 1024, %s176, [#allocation6], 256, 256, 16
        $region16: #{tpu_custom_call.1} parent=11 // pred_fallthru
          _
        // Predicated region
        $region17: #{tpu_custom_call.1} parent=11 // pred_check
          %p182 = pneg %p86
        $region18: #{tpu_custom_call.1} parent=11 // pred_check_branch
          %184 = sbr.rel (%p182) target = $region20
        $region19: #{tpu_custom_call.1} parent=11 // pred_region
          _
        $region20: #{tpu_custom_call.1} parent=11 // pred_fallthru
          _
        // Predicated region
        $region21: #{tpu_custom_call.1} parent=11 // pred_check
          %p185 = pneg %p107
        $region22: #{tpu_custom_call.1} parent=11 // pred_check_branch
          %187 = sbr.rel (%p185) target = $region24
        $region23: #{tpu_custom_call.1} parent=11 // pred_region
          _
        $region24: #{tpu_custom_call.1} parent=11 // pred_fallthru
          _
        // Predicated region
        $region25: #{tpu_custom_call.1} parent=11 // pred_check
          %p188 = pneg %p128
        $region26: #{tpu_custom_call.1} parent=11 // pred_check_branch
          %190 = sbr.rel (%p188) target = $region28
        $region27: #{tpu_custom_call.1} parent=11 // pred_region
          _
        $region28: #{tpu_custom_call.1} parent=11 // pred_fallthru
          _
      $region12: #{tpu_custom_call.1} parent=5 // pred_fallthru
        _
      %p191 = scmp.lt.s32.totalorder %s18, 2
      // Predicated region
      $region29: #{tpu_custom_call.1} parent=5 // pred_check
        %p192 = pneg %p191
      $region30: #{tpu_custom_call.1} parent=5 // pred_check_branch
        %194 = sbr.rel (%p192) target = $region32
      $region31: #{tpu_custom_call.1} parent=5 // pred_region
        // Predicated region
        $region33: #{tpu_custom_call.1} parent=31 // pred_check
          %p195 = pneg %p38
        $region34: #{tpu_custom_call.1} parent=31 // pred_check_branch
          %197 = sbr.rel (%p195) target = $region36
        $region35: #{tpu_custom_call.1} parent=31 // pred_region
          %s198 = sand.u32 %s28, 1
          %s199 = scalar_lea.sflag [#allocation3], %s198
          %s200 = sand.u32 %s28, 1
          %s201 = smul.addr %s200, 32
          %s202 = scalar_lea.vmem [#allocation2], %s201
          %s203 = smul.u32 2, %s18
          %s205 = ssub.s32 512, 512
          %206 = vsyncadd %s199, %s205
          %s207 = smul.addr %s203, 2
          %s208 = smul.addr %s207, 128
          %s209 = scalar_lea.hbm %s0, %s208
          %s210 = sshll.u32 %s202, 4
          %s211 = int_to_ptr.vmem [resolvable:$true] %s210
          %216 = dma.hbm_to_vmem [thread:$0]  %s209, 512, %s211, %s199, 128, 128, 8
        $region36: #{tpu_custom_call.1} parent=31 // pred_fallthru
          _
      $region32: #{tpu_custom_call.1} parent=5 // pred_fallthru
        _
      %p217 = scmp.le.s32.totalorder 1, %s18
      %p218 = scmp.lt.s32.totalorder %s18, 3
      %p219 = pnand %p217, %p218
      %p220 = pneg %p219
      // Predicated region
      $region37: #{tpu_custom_call.1} parent=5 // pred_check
        _
      $region38: #{tpu_custom_call.1} parent=5 // pred_check_branch
        %222 = sbr.rel (%p219) target = $region40
      $region39: #{tpu_custom_call.1} parent=5 // pred_region
        %s223 = ssub.s32 %s18, 1
        %s224 = sand.u32 %s31, 1
        %s225 = scalar_lea.sflag [#allocation3], %s224
        %s226 = sand.u32 %s31, 1
        %s227 = smul.addr %s226, 32
        %s228 = scalar_lea.vmem [#allocation2], %s227
        // Predicated region
        $region41: #{tpu_custom_call.1} parent=39 // pred_check
          %p229 = pneg %p44
        $region42: #{tpu_custom_call.1} parent=39 // pred_check_branch
          %231 = sbr.rel (%p229) target = $region44
        $region43: #{tpu_custom_call.1} parent=39 // pred_region
          %232 = dma.done %s225, 512
        $region44: #{tpu_custom_call.1} parent=39 // pred_fallthru
          _
        // Predicated region
        $region45: #{tpu_custom_call.1} parent=39 // pred_check
          %p233 = pneg %p65
        $region46: #{tpu_custom_call.1} parent=39 // pred_check_branch
          %235 = sbr.rel (%p233) target = $region48
        $region47: #{tpu_custom_call.1} parent=39 // pred_region
          %236 = dma.done [#allocation6], 1024
        $region48: #{tpu_custom_call.1} parent=39 // pred_fallthru
          _
        %s237 = sand.u32 %s31, 1
        %s238 = scalar_lea.sflag [#allocation3], %s237
        %s239 = sand.u32 %s31, 1
        %s240 = smul.addr %s239, 32
        %s241 = scalar_lea.vmem [#allocation2], %s240
        %p242 = pneg %p44
        %p243 = pneg %p41
        %p244 = pneg %p65
        %p245 = pneg %p62
        %p246 = pneg %p86
        %p247 = pneg %p83
        %p248 = pneg %p107
        %p249 = pneg %p104
        %p250 = pneg %p128
        %p251 = pneg %p125
        %p252 = pneg %p154
        %p253 = pneg %p151
        %s254 = sand.u32 %s141, 1
        %s255 = scalar_lea.sflag [#allocation4], %s254
        %s256 = sand.u32 %s141, 1
        %s257 = smul.addr %s256, 32
        %s258 = scalar_lea.vmem [#allocation7], %s257
        %s259 = smul.u32 2, %s23
        %s260 = smul.u32 2, %s23
        %v261 = vld [vmem:[%s228] sm:$0xff]
        %v262 = vld [vmem:[%s228 + $0x8] sm:$0xff]
        %v263 = vld [vmem:[%s228 + $0x10] sm:$0xff]
        %v264 = vld [vmem:[%s228 + $0x18] sm:$0xff]
        %v265 = vld [vmem:[#allocation5] sm:$0xff]
        %v266 = vld [vmem:[#allocation5 + $0x8] sm:$0xff]
        %v267 = vld [vmem:[#allocation5 + $0x10] sm:$0xff]
        %v268 = vld [vmem:[#allocation5 + $0x18] sm:$0xff]
        %v269 = vld [vmem:[#allocation5 + $0x20] sm:$0xff]
        %v270 = vld [vmem:[#allocation5 + $0x28] sm:$0xff]
        %v271 = vld [vmem:[#allocation5 + $0x30] sm:$0xff]
        %v272 = vld [vmem:[#allocation5 + $0x38] sm:$0xff]
        %vm273 = vcmask 261120
        %v275 = vsel %vm273, %v261, 0
        %v278 = vsel %vm273, %v262, 0
        %v281 = vsel %vm273, %v263, 0
        %v284 = vsel %vm273, %v264, 0
        %286 = vmatprep.subr.mxu0 0.0
        %287 = vmatpush1.msra.mxu0 0.0
        %288 = vmatprep.subr.mxu0 0.0
        %289 = vmatpush1.msra.mxu0 0.0
        %290 = vmatprep.subr.mxu0 0.0
        %291 = vmatpush1.msra.mxu0 0.0
        %292 = vmatprep.subr.mxu0 0.0
        %293 = vmatpush1.msra.mxu0 0.0
        %294 = vmatprep.subr.mxu0 0.0
        %295 = vmatpush1.msra.mxu0 0.0
        %296 = vmatprep.subr.mxu0 0.0
        %297 = vmatpush1.msra.mxu0 0.0
        %298 = vmatprep.subr.mxu0 0.0
        %299 = vmatpush1.msra.mxu0 0.0
        %300 = vmatprep.subr.mxu0 0.0
        %301 = vmatpush1.msra.mxu0 0.0
        %302 = vmatprep.subr.mxu0 0.0
        %303 = vmatpush1.msra.mxu0 0.0
        %304 = vmatprep.subr.mxu0 0.0
        %305 = vmatpush1.msra.mxu0 0.0
        %306 = vmatprep.subr.mxu0 0.0
        %307 = vmatpush1.msra.mxu0 0.0
        %308 = vmatprep.subr.mxu0 0.0
        %309 = vmatpush1.msra.mxu0 0.0
        %310 = vmatprep.subr.mxu0 %v272
        %311 = vmatpush1.msra.mxu0 %v271
        %312 = vmatprep.subr.mxu0 %v270
        %313 = vmatpush1.msra.mxu0 %v269
        %314 = vmatprep.subr.mxu0 %v268
        %315 = vmatpush1.msra.mxu0 %v267
        %316 = vmatprep.subr.mxu0 %v266
        %317 = vmatpush1.msra.mxu0 %v265
        %318 = vmatprep.subr.mxu0 0.0
        %319 = vmatpush2.msra.mxu0 0.0
        %320 = vmatprep.subr.mxu0 0.0
        %321 = vmatpush2.msra.mxu0 0.0
        %322 = vmatprep.subr.mxu0 0.0
        %323 = vmatpush2.msra.mxu0 0.0
        %324 = vmatprep.subr.mxu0 0.0
        %325 = vmatpush2.msra.mxu0 0.0
        %326 = vmatprep.subr.mxu0 0.0
        %327 = vmatpush2.msra.mxu0 0.0
        %328 = vmatprep.subr.mxu0 0.0
        %329 = vmatpush2.msra.mxu0 0.0
        %330 = vmatprep.subr.mxu0 0.0
        %331 = vmatpush2.msra.mxu0 0.0
        %332 = vmatprep.subr.mxu0 0.0
        %333 = vmatpush2.msra.mxu0 0.0
        %334 = vmatprep.subr.mxu0 0.0
        %335 = vmatpush2.msra.mxu0 0.0
        %336 = vmatprep.subr.mxu0 0.0
        %337 = vmatpush2.msra.mxu0 0.0
        %338 = vmatprep.subr.mxu0 0.0
        %339 = vmatpush2.msra.mxu0 0.0
        %340 = vmatprep.subr.mxu0 0.0
        %341 = vmatpush2.msra.mxu0 0.0
        %342 = vmatprep.subr.mxu0 0.0
        %343 = vmatpush2.msra.mxu0 0.0
        %344 = vmatprep.subr.mxu0 0.0
        %345 = vmatpush2.msra.mxu0 0.0
        %346 = vmatprep.subr.mxu0 0.0
        %347 = vmatpush2.msra.mxu0 0.0
        %348 = vmatprep.subr.mxu0 0.0
        %349 = vmatpush2.msra.mxu0 0.0
        %350 = vmatprep.mubr.f32.mxu0 0.0
        %351 = vmatmul.mubr.f32.gmra.mxu0 %v275
        %v352 = vpop.f32.mrf.mxu0
        %v353 = vadd.f32 0.0, %v352
        %v354 = vpop.f32.mrf.mxu0
        %v355 = vadd.f32 0.0, %v354
        %356 = vmatprep.mubr.f32.mxu0 0.0
        %357 = vmatmul.mubr.f32.gmra.mxu0 %v278
        %v358 = vpop.f32.mrf.mxu0
        %v359 = vadd.f32 0.0, %v358
        %v360 = vpop.f32.mrf.mxu0
        %v361 = vadd.f32 0.0, %v360
        %362 = vmatprep.mubr.f32.mxu0 0.0
        %363 = vmatmul.mubr.f32.gmra.mxu0 %v281
        %v364 = vpop.f32.mrf.mxu0
        %v365 = vadd.f32 0.0, %v364
        %v366 = vpop.f32.mrf.mxu0
        %v367 = vadd.f32 0.0, %v366
        %368 = vmatprep.mubr.f32.mxu0 0.0
        %369 = vmatmul.mubr.f32.gmra.mxu0 %v284
        %v370 = vpop.f32.mrf.mxu0
        %v371 = vadd.f32 0.0, %v370
        %v372 = vpop.f32.mrf.mxu0
        %v373 = vadd.f32 0.0, %v372
        %374 = vdwg.mxu0
        %v375 = vld [vmem:[%s3] sm:$0xff]
        %v376 = vld [vmem:[%s3 + $0x8] sm:$0xff]
        %v377 = vld [vmem:[%s3 + $0x10] sm:$0xff]
        %v378 = vld [vmem:[%s3 + $0x18] sm:$0xff]
        %380 = vset.pattern.permute.xlu0 0
        %381 = vperm.xlu0 %380, %v375
        %v382 = vpop.permute.xlu0 %381
        %385 = vset.pattern.permute.xlu0 0
        %386 = vperm.xlu0 %385, %v376
        %v387 = vpop.permute.xlu0 %386
        %390 = vset.pattern.permute.xlu0 0
        %391 = vperm.xlu0 %390, %v377
        %v392 = vpop.permute.xlu0 %391
        %395 = vset.pattern.permute.xlu0 0
        %396 = vperm.xlu0 %395, %v378
        %v397 = vpop.permute.xlu0 %396
        %v399 = vmul.f32 %v382, %v353
        %v400 = vmul.f32 %v387, %v359
        %v401 = vmul.f32 %v392, %v365
        %v402 = vmul.f32 %v397, %v371
        %v403 = vld [vmem:[%s2] sm:$0xff]
        %v404 = vld [vmem:[%s2 + $0x8] sm:$0xff]
        %v405 = vld [vmem:[%s2 + $0x10] sm:$0xff]
        %v406 = vld [vmem:[%s2 + $0x18] sm:$0xff]
        %v408 = vsel %vm273, %v403, 0
        %v411 = vsel %vm273, %v404, 0
        %v414 = vsel %vm273, %v405, 0
        %v417 = vsel %vm273, %v406, 0
        %419 = vmatprep.subr.mxu0 0.0
        %420 = vmatpush1.msra.mxu0 0.0
        %421 = vmatprep.subr.mxu0 0.0
        %422 = vmatpush1.msra.mxu0 0.0
        %423 = vmatprep.subr.mxu0 0.0
        %424 = vmatpush1.msra.mxu0 0.0
        %425 = vmatprep.subr.mxu0 0.0
        %426 = vmatpush1.msra.mxu0 0.0
        %427 = vmatprep.subr.mxu0 0.0
        %428 = vmatpush1.msra.mxu0 0.0
        %429 = vmatprep.subr.mxu0 0.0
        %430 = vmatpush1.msra.mxu0 0.0
        %431 = vmatprep.subr.mxu0 0.0
        %432 = vmatpush1.msra.mxu0 0.0
        %433 = vmatprep.subr.mxu0 0.0
        %434 = vmatpush1.msra.mxu0 0.0
        %435 = vmatprep.subr.mxu0 0.0
        %436 = vmatpush1.msra.mxu0 0.0
        %437 = vmatprep.subr.mxu0 0.0
        %438 = vmatpush1.msra.mxu0 0.0
        %439 = vmatprep.subr.mxu0 0.0
        %440 = vmatpush1.msra.mxu0 0.0
        %441 = vmatprep.subr.mxu0 0.0
        %442 = vmatpush1.msra.mxu0 0.0
        %443 = vmatprep.subr.mxu0 0.0
        %444 = vmatpush1.msra.mxu0 %v373
        %445 = vmatprep.subr.mxu0 0.0
        %446 = vmatpush1.msra.mxu0 %v367
        %447 = vmatprep.subr.mxu0 0.0
        %448 = vmatpush1.msra.mxu0 %v361
        %449 = vmatprep.subr.mxu0 0.0
        %450 = vmatpush1.msra.mxu0 %v355
        %451 = vmatprep.subr.mxu0 0.0
        %452 = vmatpush2.msra.mxu0 0.0
        %453 = vmatprep.subr.mxu0 0.0
        %454 = vmatpush2.msra.mxu0 0.0
        %455 = vmatprep.subr.mxu0 0.0
        %456 = vmatpush2.msra.mxu0 0.0
        %457 = vmatprep.subr.mxu0 0.0
        %458 = vmatpush2.msra.mxu0 0.0
        %459 = vmatprep.subr.mxu0 0.0
        %460 = vmatpush2.msra.mxu0 0.0
        %461 = vmatprep.subr.mxu0 0.0
        %462 = vmatpush2.msra.mxu0 0.0
        %463 = vmatprep.subr.mxu0 0.0
        %464 = vmatpush2.msra.mxu0 0.0
        %465 = vmatprep.subr.mxu0 0.0
        %466 = vmatpush2.msra.mxu0 0.0
        %467 = vmatprep.subr.mxu0 0.0
        %468 = vmatpush2.msra.mxu0 0.0
        %469 = vmatprep.subr.mxu0 0.0
        %470 = vmatpush2.msra.mxu0 0.0
        %471 = vmatprep.subr.mxu0 0.0
        %472 = vmatpush2.msra.mxu0 0.0
        %473 = vmatprep.subr.mxu0 0.0
        %474 = vmatpush2.msra.mxu0 0.0
        %475 = vmatprep.subr.mxu0 0.0
        %476 = vmatpush2.msra.mxu0 0.0
        %477 = vmatprep.subr.mxu0 0.0
        %478 = vmatpush2.msra.mxu0 0.0
        %479 = vmatprep.subr.mxu0 0.0
        %480 = vmatpush2.msra.mxu0 0.0
        %481 = vmatprep.subr.mxu0 0.0
        %482 = vmatpush2.msra.mxu0 0.0
        %483 = vmatprep.mubr.f32.mxu0 0.0
        %484 = vmatmul.mubr.f32.gmra.mxu0 %v408
        %v485 = vpop.f32.mrf.mxu0
        %v486 = vadd.f32 0.0, %v485
        %v487 = vpop.f32.mrf.mxu0
        %488 = vmatprep.mubr.f32.mxu0 0.0
        %489 = vmatmul.mubr.f32.gmra.mxu0 %v411
        %v490 = vpop.f32.mrf.mxu0
        %v491 = vadd.f32 0.0, %v490
        %v492 = vpop.f32.mrf.mxu0
        %493 = vmatprep.mubr.f32.mxu0 0.0
        %494 = vmatmul.mubr.f32.gmra.mxu0 %v414
        %v495 = vpop.f32.mrf.mxu0
        %v496 = vadd.f32 0.0, %v495
        %v497 = vpop.f32.mrf.mxu0
        %498 = vmatprep.mubr.f32.mxu0 0.0
        %499 = vmatmul.mubr.f32.gmra.mxu0 %v417
        %v500 = vpop.f32.mrf.mxu0
        %v501 = vadd.f32 0.0, %v500
        %v502 = vpop.f32.mrf.mxu0
        %503 = vdwg.mxu0
        %v504 = vadd.f32 %v399, %v486
        %v505 = vadd.f32 %v400, %v491
        %v506 = vadd.f32 %v401, %v496
        %v507 = vadd.f32 %v402, %v501
        %v508 = vld [vmem:[%s4] sm:$0x1]
        %v510 = vlaneseq
        %v511 = vshrl.u32 %v510, 7
        %v512 = vsub.s32 0, %v511
        %v513 = vrot.slane %v508, %v512
        %v515 = vadd.f32 %v504, %v513
        %v516 = vadd.f32 %v505, %v513
        %v517 = vadd.f32 %v506, %v513
        %v518 = vadd.f32 %v507, %v513
        %v519 = vmax.f32 %v515, 0.0
        %v520 = vmax.f32 %v516, 0.0
        %v521 = vmax.f32 %v517, 0.0
        %v522 = vmax.f32 %v518, 0.0
        %523 = vst [vmem:[%s258] sm:$0xff] %v519
        %524 = vst [vmem:[%s258 + $0x8] sm:$0xff] %v520
        %525 = vst [vmem:[%s258 + $0x10] sm:$0xff] %v521
        %526 = vst [vmem:[%s258 + $0x18] sm:$0xff] %v522
        %s527 = sand.u32 %s141, 1
        %s528 = scalar_lea.sflag [#allocation4], %s527
        %s529 = sand.u32 %s141, 1
        %s530 = smul.addr %s529, 32
        %s531 = scalar_lea.vmem [#allocation7], %s530
        // Predicated region
        $region49: #{tpu_custom_call.1} parent=39 // pred_check
          %p532 = pneg %p151
        $region50: #{tpu_custom_call.1} parent=39 // pred_check_branch
          %534 = sbr.rel (%p532) target = $region52
        $region51: #{tpu_custom_call.1} parent=39 // pred_region
          %s535 = smul.u32 2, %s23
          %s537 = ssub.s32 512, 512
          %538 = vsyncadd %s528, %s537
          %s539 = smul.addr %s535, 2
          %s540 = smul.addr %s539, 128
          %s541 = scalar_lea.hbm %s5, %s540
          %s542 = sshll.u32 %s531, 4
          %s543 = int_to_ptr.vmem [resolvable:$true] %s542
          %548 = dma.vmem_to_hbm [thread:$0]  %s543, 512, %s541, %s528, 128, 128, 8
        $region52: #{tpu_custom_call.1} parent=39 // pred_fallthru
          _
      $region40: #{tpu_custom_call.1} parent=5 // pred_fallthru
        _
      %p549 = scmp.le.s32.totalorder 2, %s18
      // Predicated region
      $region53: #{tpu_custom_call.1} parent=5 // pred_check
        %p550 = pneg %p549
      $region54: #{tpu_custom_call.1} parent=5 // pred_check_branch
        %552 = sbr.rel (%p550) target = $region56
      $region55: #{tpu_custom_call.1} parent=5 // pred_region
        %s553 = ssub.s32 %s18, 2
        // Predicated region
        $region57: #{tpu_custom_call.1} parent=55 // pred_check
          %p554 = pneg %p157
        $region58: #{tpu_custom_call.1} parent=55 // pred_check_branch
          %556 = sbr.rel (%p554) target = $region60
        $region59: #{tpu_custom_call.1} parent=55 // pred_region
          %s557 = sand.u32 %s142, 1
          %s558 = scalar_lea.sflag [#allocation4], %s557
          %s559 = sand.u32 %s142, 1
          %s560 = smul.addr %s559, 32
          %s561 = scalar_lea.vmem [#allocation7], %s560
          %562 = dma.done %s558, 512
        $region60: #{tpu_custom_call.1} parent=55 // pred_fallthru
          _
      $region56: #{tpu_custom_call.1} parent=5 // pred_fallthru
        _
    $region6: #{tpu_custom_call.1} parent=1 // loop_footer
      %s22 = sadd.s32 1, %s18
    $region7: #{tpu_custom_call.1} parent=1 // loop_footer_branch
      %17 = sbr.rel target = $region3
    $region8: #{tpu_custom_call.1} parent=1 // loop_exit
      _
    %563 = vsyncpa [#allocation3], 1
    %s564 = scalar_lea.sflag [#allocation3], 1
    %565 = vsyncpa %s564, 1
    %566 = vsyncpa [#allocation6], 1
    %567 = vsyncpa [#allocation4], 1
    %s568 = scalar_lea.sflag [#allocation4], 1
    %569 = vsyncpa %s568, 1

</llo_original>
